<compile_context>
chip_gen: v5e
topology: v5e:2x2
jax: 0.10.0
libtpu: 0.0.40
codegen_flags: <defaults>
</compile_context>

<pallas_src>
import functools

import jax
import jax.numpy as jnp
from jax.experimental import pallas as pl
from jax.experimental.pallas import tpu as pltpu


def _round_up(x, m):
  return (x + m - 1) // m * m


# ----------------------------------------------------------------------------
# Fused Pallas kernel: one grid step = `batch_block` batch elements through
# the whole network.
# ----------------------------------------------------------------------------
def fused_tcn_kernel(*refs, kernel_size, dilations, seg, batch_block, l0,
                     a_offs):
  """refs layout (inputs, output, scratch), n = number of conv layers:

    x_ref               (1, C0, LBLK)        pre-padded input slab (bf16)
    [w_i, b_i] * n      (K, C_out, C_in) bf16, (C_out, 1) f32
    fcw_ref, fcb_ref    (O, C_last) bf16, (O, 1) f32
    o_ref               (1, O, BB)           f32 output block
    bufA, bufB          (C_max, LBLK) bf16   ping-pong activation scratch

  Layout: every activation slab holds `batch_block` segments of stride `seg`
  (multiple of 128).  Layer i's input data starts at segment offset a_offs[i]
  framed by (k-1)*d_i zero halos; slicing the slab at lane offset t*d_i makes
  the tap matmul drop its output exactly at offset a_offs[i+1], i.e. where the
  next layer expects its input.  All slice indices are static Python ints.
  """
  k = kernel_size
  n = len(dilations)
  x_ref = refs[0]
  conv_refs = refs[1:1 + 2 * n]
  fcw_ref, fcb_ref, o_ref = refs[1 + 2 * n:4 + 2 * n]
  bufs = refs[4 + 2 * n:6 + 2 * n]

  p_cols = batch_block * seg          # matmul width: lane-dense, 128-aligned
  l_cur = l0

  for i in range(n):
    d = dilations[i]
    pad = (k - 1) * d
    l_out = l_cur + pad               # length grows each layer (no Chomp1d)
    w_ref = conv_refs[2 * i]          # (K, C_out, C_in) bf16
    b_ref = conv_refs[2 * i + 1]      # (C_out, 1) f32
    c_out, c_in = w_ref.shape[1], w_ref.shape[2]
    out_buf = bufs[i % 2]

    def tap(t, i=i, d=d, c_in=c_in):
      lo = t * d                      # static
      if i == 0:
        return x_ref[0, :, lo:lo + p_cols]
      return bufs[(i - 1) % 2][0:c_in, lo:lo + p_cols]

    # K accumulated tap matmuls; f32 accumulation on the MXU.
    y = jnp.dot(w_ref[0], tap(0), preferred_element_type=jnp.float32)
    for t in range(1, k):
      y = y + jnp.dot(w_ref[t], tap(t), preferred_element_type=jnp.float32)
    act = jnp.maximum(y + b_ref[...], 0.0)          # bias + ReLU (f32)
    # TODO(synk): training-mode dropout (random mask) not implemented;
    # inference-mode identity matches eval() semantics.
    out_buf[0:c_out, 0:p_cols] = act.astype(out_buf.dtype)

    # Zero only the halo strips the NEXT layer's dilated conv will read
    # (O(B * pad * C) elements -- no full-slab zero fill).
    if i < n - 1:
      pad_nxt = (k - 1) * dilations[i + 1]
      lead = a_offs[i + 2]            # == a_offs[i+1] - pad_nxt
      data = a_offs[i + 1]
      z = jnp.zeros((c_out, pad_nxt), out_buf.dtype)
      for b in range(batch_block):
        base = b * seg
        out_buf[0:c_out, base + lead:base + data] = z
        out_buf[0:c_out,
                base + data + l_out:base + data + l_out + pad_nxt] = z

    l_cur = l_out

  # y[:, :, -1]: final activations start at segment offset a_offs[n] == 0, so
  # the last valid sample sits at static offset l_cur - 1 of each segment ->
  # one static column slice per segment (no per-lane masked copy loop).
  last_buf = bufs[(n - 1) % 2]
  c_last = fcw_ref.shape[1]
  cols = [
      last_buf[0:c_last, b * seg + l_cur - 1:b * seg + l_cur]
      for b in range(batch_block)
  ]
  ylast = cols[0] if batch_block == 1 else jnp.concatenate(cols, axis=1)
  o_ref[0] = (jnp.dot(fcw_ref[...], ylast,
                      preferred_element_type=jnp.float32) + fcb_ref[...])


def _const_spec(shape):
  nd = len(shape)
  return pl.BlockSpec(shape, lambda i: (0,) * nd)


# ----------------------------------------------------------------------------
# Wrapper
# ----------------------------------------------------------------------------
def tcn_forward(params, x, kernel_size, batch_block=1):
  """x: (B, seq_len, input_size)  ->  (B, output_size)."""
  B, L, C0 = x.shape
  assert B % batch_block == 0
  G = B // batch_block
  k = kernel_size
  n = len(params["convs"])
  dils = tuple(2 ** i for i in range(n))
  pads = tuple((k - 1) * d for d in dils)

  # Per-segment data-start offsets: a_offs[i] = sum of pads[j] for j >= i,
  # a_offs[n] = 0.  Layer i's output lands at a_offs[i+1] automatically.
  a_offs = [0] * (n + 1)
  for i in range(n - 1, -1, -1):
    a_offs[i] = a_offs[i + 1] + pads[i]
  a_offs = tuple(a_offs)

  lens = [L]
  for p in pads:
    lens.append(lens[-1] + p)

  # Segment stride = largest per-layer padded footprint, rounded to 128 lanes.
  foot = max(a_offs[i] + lens[i] + pads[i] for i in range(n))
  seg = _round_up(foot, 128)
  tail = _round_up(pads[-1], 128)       # slack for the shifted tap slices
  lblk = batch_block * seg + tail

  # Input slab (G, C0, lblk): bf16, lane-dense, halo zeros built in — layer 0
  # reads it exactly like any other layer's activation buffer.
  x_cbl = jnp.transpose(x, (0, 2, 1)).astype(jnp.bfloat16)          # (B,C0,L)
  x_seg = jnp.pad(x_cbl, ((0, 0), (0, 0), (a_offs[0], seg - a_offs[0] - L)))
  x_blk = (x_seg.reshape(G, batch_block, C0, seg)
           .transpose(0, 2, 1, 3).reshape(G, C0, batch_block * seg))
  x_blk = jnp.pad(x_blk, ((0, 0), (0, 0), (0, tail)))               # (G,C0,lblk)

  conv_arrays = []
  c_max = 0
  for layer in params["convs"]:
    v, g, b = layer["v"], layer["g"], layer["b"]
    # weight_norm forward: w = g * v / ||v||_(in,ker)   (wrapper-side XLA glue)
    norm = jnp.sqrt(jnp.sum(v * v, axis=(1, 2), keepdims=True))
    w = g * v / norm                                     # (C_out, C_in, K) f32
    c_out = w.shape[0]
    c_max = max(c_max, c_out)
    w_k = jnp.transpose(w, (2, 0, 1)).astype(jnp.bfloat16)  # (K, C_out, C_in)
    conv_arrays += [w_k, b.reshape(c_out, 1).astype(jnp.float32)]

  fcw = params["fc"]["w"].astype(jnp.bfloat16)            # (O, C_last)
  out_size = fcw.shape[0]
  fcb = params["fc"]["b"].reshape(out_size, 1).astype(jnp.float32)

  in_arrays = [x_blk] + conv_arrays + [fcw, fcb]
  in_specs = ([pl.BlockSpec((1, C0, lblk), lambda i: (i, 0, 0))]
              + [_const_spec(a.shape) for a in conv_arrays]
              + [_const_spec(fcw.shape), _const_spec(fcb.shape)])
  out_spec = pl.BlockSpec((1, out_size, batch_block), lambda i: (i, 0, 0))
  scratch = [pltpu.VMEM((c_max, lblk), jnp.bfloat16) for _ in range(2)]

  # Explicit scoped-VMEM budget: 2 reused bf16 slabs + double-buffered I/O.
  blk_in_bytes = (C0 * lblk * 2
                  + sum(int(a.size) * a.dtype.itemsize for a in conv_arrays)
                  + int(fcw.size) * 2 + int(fcb.size) * 4)
  vmem_limit = int(2 * c_max * lblk * 2 + 2 * blk_in_bytes
                   + 2 * out_size * batch_block * 4) + (16 << 20)
  vmem_limit = min(vmem_limit, 120 << 20)

  kernel = functools.partial(
      fused_tcn_kernel, kernel_size=k, dilations=dils, seg=seg,
      batch_block=batch_block, l0=L, a_offs=a_offs)

  out = pl.pallas_call(
      kernel,
      out_shape=jax.ShapeDtypeStruct((G, out_size, batch_block), jnp.float32),
      grid=(G,),
      in_specs=in_specs,
      out_specs=out_spec,
      scratch_shapes=scratch,
      compiler_params=pltpu.CompilerParams(
          dimension_semantics=("parallel",),
          vmem_limit_bytes=vmem_limit),
  )(*in_arrays)
  # (G, O, BB) -> (B, O): wrapper-side layout plumbing, keeps the kernel simple.
  return out.transpose(0, 2, 1).reshape(B, out_size)


# ----------------------------------------------------------------------------
# Pure-JAX reference (for a correctness sanity check)
# ----------------------------------------------------------------------------
def tcn_reference(params, x, kernel_size):
  k = kernel_size
  y = jnp.transpose(x, (0, 2, 1)).astype(jnp.float32)
  for i, layer in enumerate(params["convs"]):
    d = 2 ** i
    pad = (k - 1) * d
    v, g = layer["v"], layer["g"]
    norm = jnp.sqrt(jnp.sum(v * v, axis=(1, 2), keepdims=True))
    w = (g * v / norm).astype(jnp.float32)
    y = jax.lax.conv_general_dilated(
        y, w, window_strides=(1,), padding=[(pad, pad)], rhs_dilation=(d,),
        dimension_numbers=("NCH", "OIH", "NCH"))
    y = jnp.maximum(y + layer["b"][None, :, None], 0.0)
  y_last = y[:, :, -1]
  return y_last @ params["fc"]["w"].T + params["fc"]["b"]


# ----------------------------------------------------------------------------
# Parameter construction (deterministic, synthetic)
# ----------------------------------------------------------------------------
def init_tcn_params(key, input_size, num_channels, kernel_size, output_size):
  params = {"convs": [], "fc": None}
  for i, out_ch in enumerate(num_channels):
    in_ch = input_size if i == 0 else num_channels[i - 1]
    key, kv, kg, kb = jax.random.split(key, 4)
    fan_in = in_ch * kernel_size
    bound = 1.0 / jnp.sqrt(fan_in)
    v = jax.random.uniform(kv, (out_ch, in_ch, kernel_size),
                           minval=-bound, maxval=bound, dtype=jnp.float32)
    # PyTorch weight_norm init: g = ||v|| over dims (1,2) per output channel
    g = jnp.sqrt(jnp.sum(v * v, axis=(1, 2), keepdims=True))
    b = jax.random.uniform(kb, (out_ch,), minval=-bound, maxval=bound,
                           dtype=jnp.float32)
    params["convs"].append({"v": v, "g": g, "b": b})
  key, kw, kb = jax.random.split(key, 3)
  c_last = num_channels[-1]
  bound = 1.0 / jnp.sqrt(c_last)
  fc_w = jax.random.uniform(kw, (output_size, c_last),
                            minval=-bound, maxval=bound, dtype=jnp.float32)
  fc_b = jax.random.uniform(kb, (output_size,),
                            minval=-bound, maxval=bound, dtype=jnp.float32)
  params["fc"] = {"w": fc_w, "b": fc_b}
  return params


# ----------------------------------------------------------------------------
if __name__ == "__main__":
  batch = 2
  seq_len = 16
  input_size = 4
  num_channels = [8, 16]
  kernel_size = 2
  output_size = 1

  key = jax.random.PRNGKey(0)
  key, kp, kx = jax.random.split(key, 3)
  params = init_tcn_params(kp, input_size, num_channels, kernel_size,
                           output_size)
  x = jax.random.normal(kx, (batch, seq_len, input_size), dtype=jnp.float32)

  out = tcn_forward(params, x, kernel_size, batch_block=1)
  out = jax.block_until_ready(out)
  assert out.shape == (batch, output_size), out.shape

  ref = jax.block_until_ready(tcn_reference(params, x, kernel_size))
  # bf16 activation/weight storage with f32 accumulation -> ~1e-3 relative;
  # 2e-2 gives margin while still catching real regressions.
  assert jnp.allclose(out, ref, rtol=2e-2, atol=2e-2), (out, ref)

  print("KERNEL_OK")
</pallas_src>

<mosaic_0001>
module attributes {stable_mosaic.version = 11 : i64} {
  func.func @fused_tcn_kernel(%arg0: i32, %arg1: memref<1x4x256xbf16, #tpu.memory_space<vmem>>, %arg2: memref<2x8x4xbf16, #tpu.memory_space<vmem>>, %arg3: memref<8x1xf32, #tpu.memory_space<vmem>>, %arg4: memref<2x16x8xbf16, #tpu.memory_space<vmem>>, %arg5: memref<16x1xf32, #tpu.memory_space<vmem>>, %arg6: memref<1x16xbf16, #tpu.memory_space<vmem>>, %arg7: memref<1x1xf32, #tpu.memory_space<vmem>>, %arg8: memref<1x1x1xf32, #tpu.memory_space<vmem>>, %arg9: memref<16x256xbf16, #tpu.memory_space<vmem>>, %arg10: memref<16x256xbf16, #tpu.memory_space<vmem>>) attributes {dimension_semantics = [#tpu.dimension_semantics<parallel>], iteration_bounds = array<i64: 2>, scalar_prefetch = 0 : i64, scratch_operands = 2 : i64, tpu.core_type = #tpu.core_type<tc>, window_params = [{transform_indices = @transform_0, window_bounds = array<i64: 1, 4, 256>}, {pipeline_mode = #tpu.pipeline_mode<synchronous>, transform_indices = @transform_1, window_bounds = array<i64: 2, 8, 4>}, {pipeline_mode = #tpu.pipeline_mode<synchronous>, transform_indices = @transform_2, window_bounds = array<i64: 8, 1>}, {pipeline_mode = #tpu.pipeline_mode<synchronous>, transform_indices = @transform_3, window_bounds = array<i64: 2, 16, 8>}, {pipeline_mode = #tpu.pipeline_mode<synchronous>, transform_indices = @transform_4, window_bounds = array<i64: 16, 1>}, {pipeline_mode = #tpu.pipeline_mode<synchronous>, transform_indices = @transform_5, window_bounds = array<i64: 1, 16>}, {pipeline_mode = #tpu.pipeline_mode<synchronous>, transform_indices = @transform_6, window_bounds = array<i64: 1, 1>}, {transform_indices = @transform_7, window_bounds = array<i64: 1, 1, 1>}]} {
    %c0 = arith.constant 0 : index
    %c0_0 = arith.constant 0 : index
    %c0_1 = arith.constant 0 : index
    %0 = vector.load %arg2[%c0, %c0_0, %c0_1] : memref<2x8x4xbf16, #tpu.memory_space<vmem>>, vector<1x8x4xbf16>
    %1 = vector.shape_cast %0 : vector<1x8x4xbf16> to vector<8x4xbf16>
    %c0_2 = arith.constant 0 : index
    %c0_3 = arith.constant 0 : index
    %c0_4 = arith.constant 0 : index
    %2 = vector.load %arg1[%c0_2, %c0_3, %c0_4] : memref<1x4x256xbf16, #tpu.memory_space<vmem>>, vector<1x4x128xbf16>
    %3 = vector.shape_cast %2 : vector<1x4x128xbf16> to vector<4x128xbf16>
    %cst = arith.constant dense<0.000000e+00> : vector<8x128xf32>
    %4 = tpu.matmul %1, %3, %cst {dimension_numbers = #tpu.dot_dimension_numbers<[1], [0], [0], [1], [0, 0, 1, 1], [], []>} : vector<8x4xbf16>, vector<4x128xbf16>, vector<8x128xf32> -> vector<8x128xf32>
    %c1 = arith.constant 1 : index
    %c0_5 = arith.constant 0 : index
    %c0_6 = arith.constant 0 : index
    %5 = vector.load %arg2[%c1, %c0_5, %c0_6] : memref<2x8x4xbf16, #tpu.memory_space<vmem>>, vector<1x8x4xbf16>
    %6 = vector.shape_cast %5 : vector<1x8x4xbf16> to vector<8x4xbf16>
    %c0_7 = arith.constant 0 : index
    %c0_8 = arith.constant 0 : index
    %c1_9 = arith.constant 1 : index
    %7 = vector.load %arg1[%c0_7, %c0_8, %c1_9] : memref<1x4x256xbf16, #tpu.memory_space<vmem>>, vector<1x4x128xbf16>
    %8 = vector.shape_cast %7 : vector<1x4x128xbf16> to vector<4x128xbf16>
    %cst_10 = arith.constant dense<0.000000e+00> : vector<8x128xf32>
    %9 = tpu.matmul %6, %8, %cst_10 {dimension_numbers = #tpu.dot_dimension_numbers<[1], [0], [0], [1], [0, 0, 1, 1], [], []>} : vector<8x4xbf16>, vector<4x128xbf16>, vector<8x128xf32> -> vector<8x128xf32>
    %10 = arith.addf %4, %9 : vector<8x128xf32>
    %c0_11 = arith.constant 0 : index
    %c0_12 = arith.constant 0 : index
    %11 = vector.load %arg3[%c0_11, %c0_12] : memref<8x1xf32, #tpu.memory_space<vmem>>, vector<8x1xf32>
    %12 = vector.broadcast %11 : vector<8x1xf32> to vector<8x128xf32>
    %13 = arith.addf %10, %12 : vector<8x128xf32>
    %cst_13 = arith.constant 0.000000e+00 : f32
    %14 = vector.broadcast %cst_13 : f32 to vector<8x128xf32>
    %15 = arith.maximumf %13, %14 : vector<8x128xf32>
    %16 = arith.truncf %15 : vector<8x128xf32> to vector<8x128xbf16>
    %c0_14 = arith.constant 0 : index
    %c0_15 = arith.constant 0 : index
    %17 = vector.load %arg9[%c0_14, %c0_15] : memref<16x256xbf16, #tpu.memory_space<vmem>>, vector<8x128xbf16>
    tpu.vector_store %arg9[%c0_14, %c0_15], %16 {strides = array<i32>} : memref<16x256xbf16, #tpu.memory_space<vmem>>, vector<8x128xbf16>,
    %cst_16 = arith.constant 0.000000e+00 : bf16
    %18 = vector.broadcast %cst_16 : bf16 to vector<8x2xbf16>
    %c0_17 = arith.constant 0 : index
    %c0_18 = arith.constant 0 : index
    %19 = vector.load %arg9[%c0_17, %c0_18] : memref<16x256xbf16, #tpu.memory_space<vmem>>, vector<8x2xbf16>
    tpu.vector_store %arg9[%c0_17, %c0_18], %18 {strides = array<i32>} : memref<16x256xbf16, #tpu.memory_space<vmem>>, vector<8x2xbf16>,
    %c0_19 = arith.constant 0 : index
    %c19 = arith.constant 19 : index
    %20 = vector.load %arg9[%c0_19, %c19] : memref<16x256xbf16, #tpu.memory_space<vmem>>, vector<8x2xbf16>
    tpu.vector_store %arg9[%c0_19, %c19], %18 {strides = array<i32>} : memref<16x256xbf16, #tpu.memory_space<vmem>>, vector<8x2xbf16>,
    %c0_20 = arith.constant 0 : index
    %c0_21 = arith.constant 0 : index
    %c0_22 = arith.constant 0 : index
    %21 = vector.load %arg4[%c0_20, %c0_21, %c0_22] : memref<2x16x8xbf16, #tpu.memory_space<vmem>>, vector<1x16x8xbf16>
    %22 = vector.shape_cast %21 : vector<1x16x8xbf16> to vector<16x8xbf16>
    %c0_23 = arith.constant 0 : index
    %c0_24 = arith.constant 0 : index
    %23 = vector.load %arg9[%c0_23, %c0_24] : memref<16x256xbf16, #tpu.memory_space<vmem>>, vector<8x128xbf16>
    %cst_25 = arith.constant dense<0.000000e+00> : vector<16x128xf32>
    %24 = tpu.matmul %22, %23, %cst_25 {dimension_numbers = #tpu.dot_dimension_numbers<[1], [0], [0], [1], [0, 0, 1, 1], [], []>} : vector<16x8xbf16>, vector<8x128xbf16>, vector<16x128xf32> -> vector<16x128xf32>
    %c1_26 = arith.constant 1 : index
    %c0_27 = arith.constant 0 : index
    %c0_28 = arith.constant 0 : index
    %25 = vector.load %arg4[%c1_26, %c0_27, %c0_28] : memref<2x16x8xbf16, #tpu.memory_space<vmem>>, vector<1x16x8xbf16>
    %26 = vector.shape_cast %25 : vector<1x16x8xbf16> to vector<16x8xbf16>
    %c0_29 = arith.constant 0 : index
    %c2 = arith.constant 2 : index
    %27 = vector.load %arg9[%c0_29, %c2] : memref<16x256xbf16, #tpu.memory_space<vmem>>, vector<8x128xbf16>
    %cst_30 = arith.constant dense<0.000000e+00> : vector<16x128xf32>
    %28 = tpu.matmul %26, %27, %cst_30 {dimension_numbers = #tpu.dot_dimension_numbers<[1], [0], [0], [1], [0, 0, 1, 1], [], []>} : vector<16x8xbf16>, vector<8x128xbf16>, vector<16x128xf32> -> vector<16x128xf32>
    %29 = arith.addf %24, %28 : vector<16x128xf32>
    %c0_31 = arith.constant 0 : index
    %c0_32 = arith.constant 0 : index
    %30 = vector.load %arg5[%c0_31, %c0_32] : memref<16x1xf32, #tpu.memory_space<vmem>>, vector<16x1xf32>
    %31 = vector.broadcast %30 : vector<16x1xf32> to vector<16x128xf32>
    %32 = arith.addf %29, %31 : vector<16x128xf32>
    %cst_33 = arith.constant 0.000000e+00 : f32
    %33 = vector.broadcast %cst_33 : f32 to vector<16x128xf32>
    %34 = arith.maximumf %32, %33 : vector<16x128xf32>
    %35 = arith.truncf %34 : vector<16x128xf32> to vector<16x128xbf16>
    %c0_34 = arith.constant 0 : index
    %c0_35 = arith.constant 0 : index
    %36 = vector.load %arg10[%c0_34, %c0_35] : memref<16x256xbf16, #tpu.memory_space<vmem>>, vector<16x128xbf16>
    tpu.vector_store %arg10[%c0_34, %c0_35], %35 {strides = array<i32>} : memref<16x256xbf16, #tpu.memory_space<vmem>>, vector<16x128xbf16>,
    %c0_36 = arith.constant 0 : index
    %c18 = arith.constant 18 : index
    %37 = vector.load %arg10[%c0_36, %c18] : memref<16x256xbf16, #tpu.memory_space<vmem>>, vector<16x1xbf16>
    %c0_37 = arith.constant 0 : index
    %c0_38 = arith.constant 0 : index
    %38 = vector.load %arg6[%c0_37, %c0_38] : memref<1x16xbf16, #tpu.memory_space<vmem>>, vector<1x16xbf16>
    %cst_39 = arith.constant dense<0.000000e+00> : vector<1x1xf32>
    %39 = tpu.matmul %38, %37, %cst_39 {dimension_numbers = #tpu.dot_dimension_numbers<[1], [0], [0], [1], [0, 0, 1, 1], [], []>} : vector<1x16xbf16>, vector<16x1xbf16>, vector<1x1xf32> -> vector<1x1xf32>
    %c0_40 = arith.constant 0 : index
    %c0_41 = arith.constant 0 : index
    %40 = vector.load %arg7[%c0_40, %c0_41] : memref<1x1xf32, #tpu.memory_space<vmem>>, vector<1x1xf32>
    %41 = arith.addf %39, %40 : vector<1x1xf32>
    %c0_42 = arith.constant 0 : index
    %c0_43 = arith.constant 0 : index
    %c0_44 = arith.constant 0 : index
    %42 = vector.load %arg8[%c0_42, %c0_43, %c0_44] : memref<1x1x1xf32, #tpu.memory_space<vmem>>, vector<1x1x1xf32>
    %43 = vector.shape_cast %42 : vector<1x1x1xf32> to vector<1x1xf32>
    %44 = vector.shape_cast %41 : vector<1x1xf32> to vector<1x1x1xf32>
    tpu.vector_store %arg8[%c0_42, %c0_43, %c0_44], %44 {strides = array<i32>} : memref<1x1x1xf32, #tpu.memory_space<vmem>>, vector<1x1x1xf32>,
    return
  }
  func.func @transform_0(%arg0: i32) -> (i32, i32, i32) {
    %c0_i32 = arith.constant 0 : i32
    %c0_i32_0 = arith.constant 0 : i32
    %c0_i32_1 = arith.constant 0 : i32
    return %arg0, %c0_i32, %c0_i32_0 : i32, i32, i32
  }
  func.func @transform_1(%arg0: i32) -> (i32, i32, i32) {
    %c0_i32 = arith.constant 0 : i32
    %c0_i32_0 = arith.constant 0 : i32
    %c0_i32_1 = arith.constant 0 : i32
    %c0_i32_2 = arith.constant 0 : i32
    return %c0_i32, %c0_i32_0, %c0_i32_1 : i32, i32, i32
  }
  func.func @transform_2(%arg0: i32) -> (i32, i32) {
    %c0_i32 = arith.constant 0 : i32
    %c0_i32_0 = arith.constant 0 : i32
    %c0_i32_1 = arith.constant 0 : i32
    return %c0_i32, %c0_i32_0 : i32, i32
  }
  func.func @transform_3(%arg0: i32) -> (i32, i32, i32) {
    %c0_i32 = arith.constant 0 : i32
    %c0_i32_0 = arith.constant 0 : i32
    %c0_i32_1 = arith.constant 0 : i32
    %c0_i32_2 = arith.constant 0 : i32
    return %c0_i32, %c0_i32_0, %c0_i32_1 : i32, i32, i32
  }
  func.func @transform_4(%arg0: i32) -> (i32, i32) {
    %c0_i32 = arith.constant 0 : i32
    %c0_i32_0 = arith.constant 0 : i32
    %c0_i32_1 = arith.constant 0 : i32
    return %c0_i32, %c0_i32_0 : i32, i32
  }
  func.func @transform_5(%arg0: i32) -> (i32, i32) {
    %c0_i32 = arith.constant 0 : i32
    %c0_i32_0 = arith.constant 0 : i32
    %c0_i32_1 = arith.constant 0 : i32
    return %c0_i32, %c0_i32_0 : i32, i32
  }
  func.func @transform_6(%arg0: i32) -> (i32, i32) {
    %c0_i32 = arith.constant 0 : i32
    %c0_i32_0 = arith.constant 0 : i32
    %c0_i32_1 = arith.constant 0 : i32
    return %c0_i32, %c0_i32_0 : i32, i32
  }
  func.func @transform_7(%arg0: i32) -> (i32, i32, i32) {
    %c0_i32 = arith.constant 0 : i32
    %c0_i32_0 = arith.constant 0 : i32
    %c0_i32_1 = arith.constant 0 : i32
    return %arg0, %c0_i32, %c0_i32_0 : i32, i32, i32
  }
}

</mosaic_0001>

<llo_original>
// kernel: tpu_custom_call.1
$region0: #{tpu_custom_call.1}
  #allocation0 [shape = 'u32[]', space=smem, size = 0x4, offset = 0x4, fixed_abs, tag = 'smem constant byte address 0x4 - core index']
  #allocation1 [shape = 'u32[72,128]{1,0:T(1,128)}', space=vmem, size = 0x9000, scoped, tag = 'internal scratch']
  #allocation2 [shape = 'bf16[16,256]{1,0:T(8,128)(2,1)}', space=vmem, size = 0x2000, scoped, tag = 'scratch operand']
  #allocation3 [shape = 'bf16[16,256]{1,0:T(8,128)(2,1)}', space=vmem, size = 0x2000, scoped, tag = 'scratch operand']
  #allocation4 [shape = 'f32[1,1]{1,0:T(1,128)S(1)}', space=vmem, size = 0x200, scoped, tag = 'scoped memory for tpu_custom_call.1']
  %s0 = inlined_call_operand.vmem [shape: bf16[2,4,256], index: 0, kind: input, shape index: {}]
  %s1 = inlined_call_operand.vmem [shape: bf16[2,8,4], index: 1, kind: input, shape index: {}]
  %s2 = inlined_call_operand.vmem [shape: f32[8,1], index: 2, kind: input, shape index: {}]
  %s3 = inlined_call_operand.vmem [shape: bf16[2,16,8], index: 3, kind: input, shape index: {}]
  %s4 = inlined_call_operand.vmem [shape: f32[16,1], index: 4, kind: input, shape index: {}]
  %s5 = inlined_call_operand.vmem [shape: bf16[1,16], index: 5, kind: input, shape index: {}]
  %s6 = inlined_call_operand.<no memory space> [shape: f32[1,1], index: 6, kind: input, shape index: {}]
  %s7 = inlined_call_operand.vmem [shape: f32[2,1,1], index: 7, kind: output, shape index: {}]
  %s8 = sld [smem:[#allocation0]]
  $region61: #{tpu_custom_call.1} parent=0
    _
  %s10 = ssub.s32 1, %s8
  %s11 = scalar_select 0, %s10, %s8
  %v12 = vstv %s6
  %13 = vst [vmem:[#allocation4] sm:$0x1] %v12
  loop: start=0, step=1, limit=4
  $region2: #{tpu_custom_call.1} parent=0 // loop_pre_header
    _
  $region3: #{tpu_custom_call.1} parent=0 // loop_header
    %s15 = sphi 0, %s19
    %p16 = scmp.ge.s32.totalorder %s15, 4
    %s25 = sphi 0, %s27
    %s28 = sphi 0, %s25
    %s29 = sphi 0, %s28
    %s45 = sphi 0, %s29
    %s49 = sphi 0, %s49
    %s51 = sphi 0, %s49
    %s52 = sphi 0, %s51
    %s66 = sphi 0, %s52
    %s70 = sphi 0, %s70
    %s72 = sphi 0, %s70
    %s73 = sphi 0, %s72
    %s87 = sphi 0, %s73
    %s91 = sphi 0, %s91
    %s93 = sphi 0, %s91
    %s94 = sphi 0, %s93
    %s108 = sphi 0, %s94
    %s112 = sphi 0, %s112
    %s114 = sphi 0, %s112
    %s115 = sphi 0, %s114
    %s129 = sphi 0, %s115
    %s133 = sphi 0, %s133
    %s135 = sphi 0, %s133
    %s136 = sphi 0, %s135
    %s150 = sphi 0, %s136
    %s154 = sphi 0, %s154
    %s156 = sphi 0, %s154
    %s157 = sphi 0, %s156
    %s171 = sphi 0, %s157
    %s177 = sphi 0, %s179
    %s180 = sphi 0, %s177
    %s181 = sphi 0, %s180
    %s197 = sphi 0, %s181
  $region4: #{tpu_custom_call.1} parent=0 // loop_header_branch
    %18 = sbr.rel (%p16) target = $region8
  $region5: #{tpu_custom_call.1} parent=0 // loop_body
    %s20 = ssub.s32 %s15, 1
    %s21 = ssub.s32 %s15, 2
    %s22 = sadd.s32 %s15, 1
    %s23 = ssub.s32 %s15, %s22
    %p24 = scmp.eq.s32.totalorder %s23, 0
    %s26 = sadd.s32 %s25, 1
    %s27 = scalar_select %p24, %s25, %s26
    %p30 = pneg %p24
    %p31 = scmp.eq.s32.totalorder %s15, 1
    %p32 = por %p30, %p31
    %p33 = scmp.ne.s32.totalorder %s25, %s28
    %p34 = scmp.eq.s32.totalorder %s15, 0
    %p35 = por %p33, %p34
    %p36 = scmp.ne.s32.totalorder %s25, %s28
    %p37 = scmp.eq.s32.totalorder %s20, 1
    %p38 = por %p36, %p37
    %p39 = scmp.ne.s32.totalorder %s28, %s29
    %p40 = scmp.eq.s32.totalorder %s20, 0
    %p41 = por %p39, %p40
    %p42 = scmp.ne.s32.totalorder %s28, %s29
    %p43 = scmp.eq.s32.totalorder %s21, 1
    %p44 = por %p42, %p43
    %p46 = scmp.ne.s32.totalorder %s29, %s45
    %p47 = scmp.eq.s32.totalorder %s21, 0
    %p48 = por %p46, %p47
    %s50 = sadd.s32 %s49, 1
    %p53 = scmp.eq.s32.totalorder %s15, 1
    %p54 = scmp.ne.s32.totalorder %s49, %s51
    %p55 = scmp.eq.s32.totalorder %s15, 0
    %p56 = por %p54, %p55
    %p57 = scmp.ne.s32.totalorder %s49, %s51
    %p58 = scmp.eq.s32.totalorder %s20, 1
    %p59 = por %p57, %p58
    %p60 = scmp.ne.s32.totalorder %s51, %s52
    %p61 = scmp.eq.s32.totalorder %s20, 0
    %p62 = por %p60, %p61
    %p63 = scmp.ne.s32.totalorder %s51, %s52
    %p64 = scmp.eq.s32.totalorder %s21, 1
    %p65 = por %p63, %p64
    %p67 = scmp.ne.s32.totalorder %s52, %s66
    %p68 = scmp.eq.s32.totalorder %s21, 0
    %p69 = por %p67, %p68
    %s71 = sadd.s32 %s70, 1
    %p74 = scmp.eq.s32.totalorder %s15, 1
    %p75 = scmp.ne.s32.totalorder %s70, %s72
    %p76 = scmp.eq.s32.totalorder %s15, 0
    %p77 = por %p75, %p76
    %p78 = scmp.ne.s32.totalorder %s70, %s72
    %p79 = scmp.eq.s32.totalorder %s20, 1
    %p80 = por %p78, %p79
    %p81 = scmp.ne.s32.totalorder %s72, %s73
    %p82 = scmp.eq.s32.totalorder %s20, 0
    %p83 = por %p81, %p82
    %p84 = scmp.ne.s32.totalorder %s72, %s73
    %p85 = scmp.eq.s32.totalorder %s21, 1
    %p86 = por %p84, %p85
    %p88 = scmp.ne.s32.totalorder %s73, %s87
    %p89 = scmp.eq.s32.totalorder %s21, 0
    %p90 = por %p88, %p89
    %s92 = sadd.s32 %s91, 1
    %p95 = scmp.eq.s32.totalorder %s15, 1
    %p96 = scmp.ne.s32.totalorder %s91, %s93
    %p97 = scmp.eq.s32.totalorder %s15, 0
    %p98 = por %p96, %p97
    %p99 = scmp.ne.s32.totalorder %s91, %s93
    %p100 = scmp.eq.s32.totalorder %s20, 1
    %p101 = por %p99, %p100
    %p102 = scmp.ne.s32.totalorder %s93, %s94
    %p103 = scmp.eq.s32.totalorder %s20, 0
    %p104 = por %p102, %p103
    %p105 = scmp.ne.s32.totalorder %s93, %s94
    %p106 = scmp.eq.s32.totalorder %s21, 1
    %p107 = por %p105, %p106
    %p109 = scmp.ne.s32.totalorder %s94, %s108
    %p110 = scmp.eq.s32.totalorder %s21, 0
    %p111 = por %p109, %p110
    %s113 = sadd.s32 %s112, 1
    %p116 = scmp.eq.s32.totalorder %s15, 1
    %p117 = scmp.ne.s32.totalorder %s112, %s114
    %p118 = scmp.eq.s32.totalorder %s15, 0
    %p119 = por %p117, %p118
    %p120 = scmp.ne.s32.totalorder %s112, %s114
    %p121 = scmp.eq.s32.totalorder %s20, 1
    %p122 = por %p120, %p121
    %p123 = scmp.ne.s32.totalorder %s114, %s115
    %p124 = scmp.eq.s32.totalorder %s20, 0
    %p125 = por %p123, %p124
    %p126 = scmp.ne.s32.totalorder %s114, %s115
    %p127 = scmp.eq.s32.totalorder %s21, 1
    %p128 = por %p126, %p127
    %p130 = scmp.ne.s32.totalorder %s115, %s129
    %p131 = scmp.eq.s32.totalorder %s21, 0
    %p132 = por %p130, %p131
    %s134 = sadd.s32 %s133, 1
    %p137 = scmp.eq.s32.totalorder %s15, 1
    %p138 = scmp.ne.s32.totalorder %s133, %s135
    %p139 = scmp.eq.s32.totalorder %s15, 0
    %p140 = por %p138, %p139
    %p141 = scmp.ne.s32.totalorder %s133, %s135
    %p142 = scmp.eq.s32.totalorder %s20, 1
    %p143 = por %p141, %p142
    %p144 = scmp.ne.s32.totalorder %s135, %s136
    %p145 = scmp.eq.s32.totalorder %s20, 0
    %p146 = por %p144, %p145
    %p147 = scmp.ne.s32.totalorder %s135, %s136
    %p148 = scmp.eq.s32.totalorder %s21, 1
    %p149 = por %p147, %p148
    %p151 = scmp.ne.s32.totalorder %s136, %s150
    %p152 = scmp.eq.s32.totalorder %s21, 0
    %p153 = por %p151, %p152
    %s155 = sadd.s32 %s154, 1
    %p158 = scmp.eq.s32.totalorder %s15, 1
    %p159 = scmp.ne.s32.totalorder %s154, %s156
    %p160 = scmp.eq.s32.totalorder %s15, 0
    %p161 = por %p159, %p160
    %p162 = scmp.ne.s32.totalorder %s154, %s156
    %p163 = scmp.eq.s32.totalorder %s20, 1
    %p164 = por %p162, %p163
    %p165 = scmp.ne.s32.totalorder %s156, %s157
    %p166 = scmp.eq.s32.totalorder %s20, 0
    %p167 = por %p165, %p166
    %p168 = scmp.ne.s32.totalorder %s156, %s157
    %p169 = scmp.eq.s32.totalorder %s21, 1
    %p170 = por %p168, %p169
    %p172 = scmp.ne.s32.totalorder %s157, %s171
    %p173 = scmp.eq.s32.totalorder %s21, 0
    %p174 = por %p172, %p173
    %s175 = ssub.s32 %s15, %s22
    %p176 = scmp.eq.s32.totalorder %s175, 0
    %s178 = sadd.s32 %s177, 1
    %s179 = scalar_select %p176, %s177, %s178
    %p182 = pneg %p176
    %p183 = scmp.eq.s32.totalorder %s15, 1
    %p184 = por %p182, %p183
    %p185 = scmp.ne.s32.totalorder %s177, %s180
    %p186 = scmp.eq.s32.totalorder %s15, 0
    %p187 = por %p185, %p186
    %p188 = scmp.ne.s32.totalorder %s177, %s180
    %p189 = scmp.eq.s32.totalorder %s20, 1
    %p190 = por %p188, %p189
    %p191 = scmp.ne.s32.totalorder %s180, %s181
    %p192 = scmp.eq.s32.totalorder %s20, 0
    %p193 = por %p191, %p192
    %p194 = scmp.ne.s32.totalorder %s180, %s181
    %p195 = scmp.eq.s32.totalorder %s21, 1
    %p196 = por %p194, %p195
    %p198 = scmp.ne.s32.totalorder %s181, %s197
    %p199 = scmp.eq.s32.totalorder %s21, 0
    %p200 = por %p198, %p199
    %p201 = scmp.le.s32.totalorder 1, %s15
    %p202 = scmp.lt.s32.totalorder %s15, 3
    %p203 = pnand %p201, %p202
    %p204 = pneg %p203
    // Predicated region
    $region9: #{tpu_custom_call.1} parent=5 // pred_check
      _
    $region10: #{tpu_custom_call.1} parent=5 // pred_check_branch
      %206 = sbr.rel (%p203) target = $region12
    $region11: #{tpu_custom_call.1} parent=5 // pred_region
      %s207 = ssub.s32 %s15, 1
      // Predicated region
      $region13: #{tpu_custom_call.1} parent=11 // pred_check
        %p208 = pneg %p62
      $region14: #{tpu_custom_call.1} parent=11 // pred_check_branch
        %210 = sbr.rel (%p208) target = $region16
      $region15: #{tpu_custom_call.1} parent=11 // pred_region
        _
      $region16: #{tpu_custom_call.1} parent=11 // pred_fallthru
        _
      // Predicated region
      $region17: #{tpu_custom_call.1} parent=11 // pred_check
        %p211 = pneg %p83
      $region18: #{tpu_custom_call.1} parent=11 // pred_check_branch
        %213 = sbr.rel (%p211) target = $region20
      $region19: #{tpu_custom_call.1} parent=11 // pred_region
        _
      $region20: #{tpu_custom_call.1} parent=11 // pred_fallthru
        _
      // Predicated region
      $region21: #{tpu_custom_call.1} parent=11 // pred_check
        %p214 = pneg %p104
      $region22: #{tpu_custom_call.1} parent=11 // pred_check_branch
        %216 = sbr.rel (%p214) target = $region24
      $region23: #{tpu_custom_call.1} parent=11 // pred_region
        _
      $region24: #{tpu_custom_call.1} parent=11 // pred_fallthru
        _
      // Predicated region
      $region25: #{tpu_custom_call.1} parent=11 // pred_check
        %p217 = pneg %p125
      $region26: #{tpu_custom_call.1} parent=11 // pred_check_branch
        %219 = sbr.rel (%p217) target = $region28
      $region27: #{tpu_custom_call.1} parent=11 // pred_region
        _
      $region28: #{tpu_custom_call.1} parent=11 // pred_fallthru
        _
      // Predicated region
      $region29: #{tpu_custom_call.1} parent=11 // pred_check
        %p220 = pneg %p146
      $region30: #{tpu_custom_call.1} parent=11 // pred_check_branch
        %222 = sbr.rel (%p220) target = $region32
      $region31: #{tpu_custom_call.1} parent=11 // pred_region
        _
      $region32: #{tpu_custom_call.1} parent=11 // pred_fallthru
        _
      // Predicated region
      $region33: #{tpu_custom_call.1} parent=11 // pred_check
        %p223 = pneg %p167
      $region34: #{tpu_custom_call.1} parent=11 // pred_check_branch
        %225 = sbr.rel (%p223) target = $region36
      $region35: #{tpu_custom_call.1} parent=11 // pred_region
        _
      $region36: #{tpu_custom_call.1} parent=11 // pred_fallthru
        _
    $region12: #{tpu_custom_call.1} parent=5 // pred_fallthru
      _
    %p226 = scmp.lt.s32.totalorder %s15, 2
    // Predicated region
    $region37: #{tpu_custom_call.1} parent=5 // pred_check
      %p227 = pneg %p226
    $region38: #{tpu_custom_call.1} parent=5 // pred_check_branch
      %229 = sbr.rel (%p227) target = $region40
    $region39: #{tpu_custom_call.1} parent=5 // pred_region
      // Predicated region
      $region41: #{tpu_custom_call.1} parent=39 // pred_check
        %p230 = pneg %p35
      $region42: #{tpu_custom_call.1} parent=39 // pred_check_branch
        %232 = sbr.rel (%p230) target = $region44
      $region43: #{tpu_custom_call.1} parent=39 // pred_region
        %p233 = scmp.lt.s32.totalorder %s15, 1
        %s234 = scalar_select %p233, %s15, 1
        %s235 = smul.addr %s234, 2
        %s236 = smul.addr %s235, 2
        %s237 = scalar_lea.vmem %s0, %s236
      $region44: #{tpu_custom_call.1} parent=39 // pred_fallthru
        _
    $region40: #{tpu_custom_call.1} parent=5 // pred_fallthru
      _
    %p238 = scmp.le.s32.totalorder 1, %s15
    %p239 = scmp.lt.s32.totalorder %s15, 3
    %p240 = pnand %p238, %p239
    %p241 = pneg %p240
    // Predicated region
    $region45: #{tpu_custom_call.1} parent=5 // pred_check
      _
    $region46: #{tpu_custom_call.1} parent=5 // pred_check_branch
      %243 = sbr.rel (%p240) target = $region48
    $region47: #{tpu_custom_call.1} parent=5 // pred_region
      %s244 = ssub.s32 %s15, 1
      %p245 = scmp.lt.s32.totalorder %s20, 1
      %s246 = scalar_select %p245, %s20, 1
      %s247 = smul.addr %s246, 2
      %s248 = smul.addr %s247, 2
      %s249 = scalar_lea.vmem %s0, %s248
      %p250 = pneg %p41
      %p251 = pneg %p38
      %p252 = pneg %p62
      %p253 = pneg %p59
      %p254 = pneg %p83
      %p255 = pneg %p80
      %p256 = pneg %p104
      %p257 = pneg %p101
      %p258 = pneg %p125
      %p259 = pneg %p122
      %p260 = pneg %p146
      %p261 = pneg %p143
      %p262 = pneg %p167
      %p263 = pneg %p164
      %p264 = pneg %p193
      %p265 = pneg %p190
      %p266 = scmp.lt.s32.totalorder %s20, 1
      %s267 = scalar_select %p266, %s20, 1
      %s268 = scalar_lea.vmem %s7, %s267
      %p269 = scmp.lt.s32.totalorder %s20, 1
      %s270 = scalar_select %p269, %s20, 1
      %s271 = smul.addr %s270, 2
      %s272 = smul.addr %s271, 2
      %s273 = scalar_lea.vmem %s0, %s272
      %p274 = scmp.lt.s32.totalorder %s20, 1
      %s275 = scalar_select %p274, %s20, 1
      %s276 = scalar_lea.vmem %s7, %s275
      %v278 = vld [vmem:[%s1] sm:$0xf]
      %v279 = vld [vmem:[%s273] sm:$0x3]
      %s280 = scalar_lea.vmem %s1, 4
      %v281 = vld [vmem:[%s280] sm:$0xf]
      %v282 = vld [vmem:[%s273] sm:$0xf]
      %284 = vst [vmem:[#allocation1] ss:$4 sm:$0xff] %v282
      %v285 = vld.sshfl [vmem:[#allocation1] sm:$0xff pattern:$0x73625140]
      %v287 = vld.sshfl [vmem:[#allocation1 + $0x8] sm:$0xff pattern:$0x73625140]
      %289 = vrot.lane.b32.xlu0 %v285, 127
      %v290 = vpop.permute.xlu0 %289
      %291 = vrot.lane.b32.xlu0 %v287, 127
      %v292 = vpop.permute.xlu0 %291
      %vm293 = vcmask 1039360
      %v294 = vsel %vm293, %v290, %v292
      %vm295 = vcmask 31744
      %v297 = vsel %vm295, %v281, 0
      %vm299 = vcmask 1041408
      %v301 = vsel %vm299, %v294, 0
      %303 = vmatpush.bf16.msra.mxu0 0
      %304 = vmatpush.bf16.msra.mxu0 0
      %305 = vmatpush.bf16.msra.mxu0 0
      %306 = vmatpush.bf16.msra.mxu0 0
      %307 = vmatpush.bf16.msra.mxu0 0
      %308 = vmatpush.bf16.msra.mxu0 0
      %309 = vmatpush.bf16.msra.mxu0 0
      %310 = vmatpush.bf16.msra.mxu0 %v301
      %311 = vmatmul.bf16.gmra.mxu0 %v297
      %v312 = vpop.f32.mrf.mxu0
      %v313 = vadd.f32 0.0, %v312
      %v314 = vpop.f32.mrf.mxu0
      %315 = vdwg.mxu0
      %v317 = vsel %vm295, %v278, 0
      %v320 = vsel %vm299, %v279, 0
      %322 = vmatpush.bf16.msra.mxu0 0
      %323 = vmatpush.bf16.msra.mxu0 0
      %324 = vmatpush.bf16.msra.mxu0 0
      %325 = vmatpush.bf16.msra.mxu0 0
      %326 = vmatpush.bf16.msra.mxu0 0
      %327 = vmatpush.bf16.msra.mxu0 0
      %328 = vmatpush.bf16.msra.mxu0 0
      %329 = vmatpush.bf16.msra.mxu0 %v320
      %330 = vmatmul.bf16.gmra.mxu0 %v317
      %v331 = vpop.f32.mrf.mxu0
      %v332 = vadd.f32 %v313, %v331
      %v333 = vpop.f32.mrf.mxu0
      %334 = vdwg.mxu0
      %v335 = vld [vmem:[%s2] sm:$0xff]
      %337 = vset.pattern.permute.xlu0 0
      %338 = vperm.xlu0 %337, %v335
      %v339 = vpop.permute.xlu0 %338
      %v341 = vadd.f32 %v332, %v339
      %v342 = vmax.f32 %v341, 0.0
      %v343 = vpack.c.bf16 %v342, %v342
      %344 = vst [vmem:[#allocation2] sm:$0xf] %v343
      %vm345 = vcmask 11264
      %346 = vst.msk [vmem:[#allocation2] sm:$0xf] %vm345, 0
      %vm347 = vcmask 167064
      %348 = vst.msk [vmem:[#allocation2] sm:$0xf] %vm347, 0
      %v349 = vld [vmem:[%s3] sm:$0xf]
      %v350 = vld [vmem:[%s3 + $0x4] sm:$0xf]
      %v351 = vld [vmem:[#allocation2] sm:$0xf]
      %s352 = scalar_lea.vmem %s3, 8
      %v353 = vld [vmem:[%s352] sm:$0xf]
      %v354 = vld [vmem:[%s352 + $0x4] sm:$0xf]
      %v355 = vld [vmem:[#allocation2] sm:$0xff]
      %v358 = vunpack.c.l.b16 %v353
      %v359 = vunpack.c.l.b16 %v354
      %v360 = vpack.c.b16 %v359, %v358
      %v362 = vunpack.c.l.b16 %v355
      %v363 = vunpack.c.h.b16 %v355
      %v364 = vpack.c.b16 %v362, %v362
      %v365 = vpack.c.b16 %v363, %v363
      %366 = vrot.lane.b32.xlu0 %v364, 126
      %v367 = vpop.permute.xlu0 %366
      %368 = vrot.lane.b32.xlu0 %v365, 126
      %v369 = vpop.permute.xlu0 %368
      %vm370 = vcmask 1031168
      %v371 = vsel %vm370, %v367, %v369
      %vm372 = vcmask 64512
      %v374 = vsel %vm372, %v360, 0
      %vm376 = vcmask 1043456
      %v378 = vsel %vm376, %v371, 0
      %380 = vmatpush.bf16.msra.mxu0 0
      %381 = vmatpush.bf16.msra.mxu0 0
      %382 = vmatpush.bf16.msra.mxu0 0
      %383 = vmatpush.bf16.msra.mxu0 0
      %384 = vmatpush.bf16.msra.mxu0 0
      %385 = vmatpush.bf16.msra.mxu0 0
      %386 = vmatpush.bf16.msra.mxu0 0
      %387 = vmatpush.bf16.msra.mxu0 %v378
      %388 = vmatmul.bf16.gmra.mxu0 %v374
      %v389 = vpop.f32.mrf.mxu0
      %v390 = vadd.f32 0.0, %v389
      %v391 = vpop.f32.mrf.mxu0
      %v392 = vadd.f32 0.0, %v391
      %393 = vdwg.mxu0
      %v396 = vunpack.c.l.b16 %v349
      %v397 = vunpack.c.l.b16 %v350
      %v398 = vpack.c.b16 %v397, %v396
      %v400 = vsel %vm372, %v398, 0
      %v403 = vsel %vm376, %v351, 0
      %405 = vmatpush.bf16.msra.mxu0 0
      %406 = vmatpush.bf16.msra.mxu0 0
      %407 = vmatpush.bf16.msra.mxu0 0
      %408 = vmatpush.bf16.msra.mxu0 0
      %409 = vmatpush.bf16.msra.mxu0 0
      %410 = vmatpush.bf16.msra.mxu0 0
      %411 = vmatpush.bf16.msra.mxu0 0
      %412 = vmatpush.bf16.msra.mxu0 %v403
      %413 = vmatmul.bf16.gmra.mxu0 %v400
      %v414 = vpop.f32.mrf.mxu0
      %v415 = vadd.f32 %v390, %v414
      %v416 = vpop.f32.mrf.mxu0
      %v417 = vadd.f32 %v392, %v416
      %418 = vdwg.mxu0
      %v419 = vld [vmem:[%s4] sm:$0xff]
      %v420 = vld [vmem:[%s4 + $0x8] sm:$0xff]
      %422 = vset.pattern.permute.xlu0 0
      %423 = vperm.xlu0 %422, %v419
      %v424 = vpop.permute.xlu0 %423
      %427 = vset.pattern.permute.xlu0 0
      %428 = vperm.xlu0 %427, %v420
      %v429 = vpop.permute.xlu0 %428
      %v431 = vadd.f32 %v415, %v424
      %v432 = vadd.f32 %v417, %v429
      %v433 = vmax.f32 %v431, 0.0
      %v434 = vmax.f32 %v432, 0.0
      %v435 = vpack.c.bf16 %v433, %v433
      %v436 = vpack.c.bf16 %v434, %v434
      %437 = vst [vmem:[#allocation3] sm:$0xf] %v435
      %438 = vst [vmem:[#allocation3 + $0x8] sm:$0xf] %v436
      %v439 = vld [vmem:[#allocation3] sm:$0xf]
      %v440 = vld [vmem:[#allocation3 + $0x8] sm:$0xf]
      %v441 = vld [vmem:[%s5] sm:$0x1]
      %v442 = vld [vmem:[#allocation4] sm:$0x1]
      %v445 = vunpack.c.l.b16 %v439
      %v446 = vunpack.c.l.b16 %v440
      %v447 = vpack.c.b16 %v446, %v445
      %448 = vrot.lane.b32.xlu0 %v447, 110
      %v449 = vpop.permute.xlu0 %448
      %vm451 = vcmask 130048
      %v453 = vsel %vm451, %v441, 0
      %455 = vmatpush.bf16.msra.mxu0 0
      %456 = vmatpush.bf16.msra.mxu0 0
      %457 = vmatpush.bf16.msra.mxu0 0
      %458 = vmatpush.bf16.msra.mxu0 0
      %459 = vmatpush.bf16.msra.mxu0 0
      %460 = vmatpush.bf16.msra.mxu0 0
      %461 = vmatpush.bf16.msra.mxu0 0
      %462 = vmatpush.bf16.msra.mxu0 %v449
      %463 = vmatmul.bf16.gmra.mxu0 %v453
      %v464 = vpop.f32.mrf.mxu0
      %v465 = vadd.f32 %v442, %v464
      %v466 = vpop.f32.mrf.mxu0
      %467 = vdwg.mxu0
      %vm468 = vcmask 0
      %469 = vst.msk [vmem:[%s276] sm:$0x1] %vm468, %v465
      %p470 = scmp.lt.s32.totalorder %s20, 1
      %s471 = scalar_select %p470, %s20, 1
      %s472 = scalar_lea.vmem %s7, %s471
      // Predicated region
      $region49: #{tpu_custom_call.1} parent=47 // pred_check
        %p473 = pneg %p190
      $region50: #{tpu_custom_call.1} parent=47 // pred_check_branch
        %475 = sbr.rel (%p473) target = $region52
      $region51: #{tpu_custom_call.1} parent=47 // pred_region
        _
      $region52: #{tpu_custom_call.1} parent=47 // pred_fallthru
        _
    $region48: #{tpu_custom_call.1} parent=5 // pred_fallthru
      _
    %p476 = scmp.le.s32.totalorder 2, %s15
    // Predicated region
    $region53: #{tpu_custom_call.1} parent=5 // pred_check
      %p477 = pneg %p476
    $region54: #{tpu_custom_call.1} parent=5 // pred_check_branch
      %479 = sbr.rel (%p477) target = $region56
    $region55: #{tpu_custom_call.1} parent=5 // pred_region
      %s480 = ssub.s32 %s15, 2
      // Predicated region
      $region57: #{tpu_custom_call.1} parent=55 // pred_check
        %p481 = pneg %p196
      $region58: #{tpu_custom_call.1} parent=55 // pred_check_branch
        %483 = sbr.rel (%p481) target = $region60
      $region59: #{tpu_custom_call.1} parent=55 // pred_region
        %p484 = scmp.lt.s32.totalorder %s21, 1
        %s485 = scalar_select %p484, %s21, 1
        %s486 = scalar_lea.vmem %s7, %s485
      $region60: #{tpu_custom_call.1} parent=55 // pred_fallthru
        _
    $region56: #{tpu_custom_call.1} parent=5 // pred_fallthru
      _
  $region6: #{tpu_custom_call.1} parent=0 // loop_footer
    %s19 = sadd.s32 1, %s15
  $region7: #{tpu_custom_call.1} parent=0 // loop_footer_branch
    %14 = sbr.rel target = $region3
  $region8: #{tpu_custom_call.1} parent=0 // loop_exit
    _

</llo_original>
